<compile_context>
chip_gen: v6e
topology: v6e:2x2x1
jax: 0.10.0
libtpu: 0.0.40
codegen_flags: <defaults>
</compile_context>

<pallas_src>
import functools

import jax
import jax.numpy as jnp
from jax.experimental import pallas as pl
from jax.experimental.pallas import tpu as pltpu


def _round_up(v, m):
    return ((v + m - 1) // m) * m


def _cdiv(a, b):
    return -(-a // b)


def _decoder_rescat_kernel(x_ref, wx_ref, b1_ref, gamma_ref, beta_ref,
                           wy_ref, b2_ref, o_ref, *, eps, hidden, h_pad):
    # x_ref:    (tile_n, F_in)             -- input rows (native dtype)
    # wx_ref:   (F_in, h_pad + f_out_pad)  -- [W1^T (padded) | W2x^T (padded)], compute dtype
    # b1/gamma/beta: (1, h_pad)  f32, zero-padded past `hidden`
    # wy_ref:   (h_pad, f_out_pad)         -- W2y^T (zero-padded), compute dtype
    # b2_ref:   (1, f_out_pad)  f32
    # o_ref:    (tile_n, f_out_pad)
    #
    # Cast x to the MXU compute dtype (bf16 by default) inside the kernel;
    # this is free here and avoids an extra HBM pass in the wrapper.
    x = x_ref[...].astype(wx_ref.dtype)

    # ---- single fused MXU matmul over the shared x operand ----
    xw = jnp.dot(x, wx_ref[...], preferred_element_type=jnp.float32)
    h = xw[:, :h_pad] + b1_ref[...]         # Linear output; padded cols are exactly 0
    xc = xw[:, h_pad:]                      # x @ W2x^T contribution to fc

    # ---- LayerNorm (+ ReLU); one-pass variance over the real `hidden` cols ----
    # (padded h columns are 0, so the plain sums already equal sums over `hidden`)
    inv_h = 1.0 / float(hidden)
    u = jnp.sum(h, axis=-1, keepdims=True) * inv_h
    s = jnp.sum(h * h, axis=-1, keepdims=True) * inv_h - u * u
    scale = gamma_ref[...] * jax.lax.rsqrt(s + eps)          # gamma folded into rsqrt
    y = jnp.maximum((h - u) * scale + beta_ref[...], 0.0)    # padded cols -> 0

    # ---- fc on concat([x, y]) as split matmul (x part already in xc) ----
    out = xc + jnp.dot(y.astype(wy_ref.dtype), wy_ref[...],
                       preferred_element_type=jnp.float32) + b2_ref[...]
    o_ref[...] = out.astype(o_ref.dtype)


def prepare_decoder_rescat_params(params, *, compute_dtype=jnp.bfloat16):
    """One-time conversion of torch-layout params into kernel-layout arrays.

    compute_dtype is the MXU operand dtype (bf16 default: native MXU rate and
    half the weight/x DMA bytes).  Accumulation / LayerNorm stay f32.
    """
    w1, b1, gamma, beta, w2, b2 = params
    hidden, f_in = w1.shape                 # torch Linear weight: (out, in)
    f_out = w2.shape[0]
    assert w2.shape == (f_out, f_in + hidden)

    h_pad = _round_up(hidden, 128)
    f_out_pad = _round_up(f_out, 128)

    w1_t = jnp.zeros((f_in, h_pad), compute_dtype)
    w1_t = w1_t.at[:, :hidden].set(jnp.transpose(w1).astype(compute_dtype))
    w2x_t = jnp.zeros((f_in, f_out_pad), compute_dtype)
    w2x_t = w2x_t.at[:, :f_out].set(jnp.transpose(w2[:, :f_in]).astype(compute_dtype))
    wx = jnp.concatenate([w1_t, w2x_t], axis=1)              # (F_in, h_pad + f_out_pad)

    wy = jnp.zeros((h_pad, f_out_pad), compute_dtype)
    wy = wy.at[:hidden, :f_out].set(jnp.transpose(w2[:, f_in:]).astype(compute_dtype))

    b1p = jnp.zeros((1, h_pad), jnp.float32).at[:, :hidden].set(b1.astype(jnp.float32))
    gp = jnp.zeros((1, h_pad), jnp.float32).at[:, :hidden].set(gamma.astype(jnp.float32))
    bp = jnp.zeros((1, h_pad), jnp.float32).at[:, :hidden].set(beta.astype(jnp.float32))
    b2p = jnp.zeros((1, f_out_pad), jnp.float32).at[:, :f_out].set(b2.astype(jnp.float32))

    meta = dict(f_in=f_in, hidden=hidden, h_pad=h_pad,
                f_out=f_out, f_out_pad=f_out_pad, compute_dtype=compute_dtype)
    return (wx, b1p, gp, bp, wy, b2p), meta


def decoder_rescat(x, prepared, meta, *, tile_n=1024, eps=1e-5):
    """x: (..., in_features) -> (..., f_out_pad).

    NOTE: the last dim of the result is padded to a multiple of 128 lanes;
    columns [out_features, f_out_pad) are exact zeros.  Keeping them avoids an
    extra full HBM pass just to trim 60-wide columns -- the consumer indexes
    the first `meta['f_out']` columns (or fuses the slice into its own op).
    """
    wx, b1p, gp, bp, wy, b2p = prepared
    f_in = meta["f_in"]
    hidden = meta["hidden"]
    h_pad = meta["h_pad"]
    f_out_pad = meta["f_out_pad"]

    lead_shape = x.shape[:-1]
    assert x.shape[-1] == f_in
    x2 = x.reshape(-1, f_in)
    n = x2.shape[0]

    # Balanced row tiling: tiles ~ n / steps (rounded to 8 sublanes) so padding
    # is tiny / usually zero, with >= 2 grid steps whenever possible so both
    # v7x TensorCores get work (grid axis is "parallel").
    max_tile = _round_up(max(tile_n, 8), 8)
    steps = max(_cdiv(n, max_tile), 2 if n >= 16 else 1)
    tile_rows = min(max_tile, _round_up(_cdiv(n, steps), 8))
    grid_n = _cdiv(n, tile_rows)
    n_pad = grid_n * tile_rows
    if n_pad != n:
        x2 = jnp.pad(x2, ((0, n_pad - n), (0, 0)))

    kernel = functools.partial(_decoder_rescat_kernel,
                               eps=eps, hidden=hidden, h_pad=h_pad)
    full = lambda shape: pl.BlockSpec(shape, lambda i: tuple(0 for _ in shape))

    # Advisory cost estimate so XLA can overlap neighbouring ops.
    flops = 2 * n_pad * (f_in * (h_pad + f_out_pad) + h_pad * f_out_pad)
    weight_bytes = sum(int(a.size) * a.dtype.itemsize for a in prepared)
    bytes_accessed = (n_pad * f_in * x.dtype.itemsize
                      + n_pad * f_out_pad * x.dtype.itemsize
                      + weight_bytes)

    out = pl.pallas_call(
        kernel,
        out_shape=jax.ShapeDtypeStruct((n_pad, f_out_pad), x.dtype),
        grid_spec=pltpu.PrefetchScalarGridSpec(
            num_scalar_prefetch=0,
            grid=(grid_n,),
            in_specs=[
                pl.BlockSpec((tile_rows, f_in), lambda i: (i, 0)),   # x rows
                full(wx.shape),                                      # [W1^T | W2x^T]
                full(b1p.shape),                                     # b1
                full(gp.shape),                                      # gamma
                full(bp.shape),                                      # beta
                full(wy.shape),                                      # W2y^T
                full(b2p.shape),                                     # b2
            ],
            out_specs=pl.BlockSpec((tile_rows, f_out_pad), lambda i: (i, 0)),
        ),
        compiler_params=pltpu.CompilerParams(
            dimension_semantics=("parallel",),
            vmem_limit_bytes=32 * 1024 * 1024),
        cost_estimate=pl.CostEstimate(
            flops=flops, transcendentals=n_pad, bytes_accessed=bytes_accessed),
    )(x2, wx, b1p, gp, bp, wy, b2p)

    if n_pad != n:                 # only slice rows when rows were padded
        out = out[:n]
    return out.reshape(*lead_shape, f_out_pad)


def _reference(x, params, eps=1e-5):
    """Pure-JAX reference mirroring the PyTorch module (f32)."""
    w1, b1, gamma, beta, w2, b2 = params
    h = x @ w1.T + b1
    u = jnp.mean(h, axis=-1, keepdims=True)
    s = jnp.mean((h - u) ** 2, axis=-1, keepdims=True)
    h = (h - u) / jnp.sqrt(s + eps)
    y = jnp.maximum(gamma * h + beta, 0.0)
    cat = jnp.concatenate([x, y], axis=-1)
    return cat @ w2.T + b2


if __name__ == "__main__":
    batch, seq = 2, 8
    in_features = 64      # DecoderResCat(in_features=...)
    hidden_size = 32      # DecoderResCat(hidden_size=...)
    out_features = 60     # default out_features=60

    key = jax.random.PRNGKey(0)
    k_x, k_w1, k_b1, k_w2, k_b2 = jax.random.split(key, 5)

    x = jax.random.normal(k_x, (batch, seq, in_features), dtype=jnp.float32)

    # Deterministic parameter init (torch Linear layout: weight = (out, in)).
    w1 = jax.random.normal(k_w1, (hidden_size, in_features), jnp.float32) * 0.05
    b1 = jax.random.normal(k_b1, (hidden_size,), jnp.float32) * 0.05
    gamma = jnp.ones((hidden_size,), jnp.float32)      # LayerNorm weight
    beta = jnp.zeros((hidden_size,), jnp.float32)      # LayerNorm bias
    w2 = jax.random.normal(k_w2, (out_features, hidden_size + in_features),
                           jnp.float32) * 0.05
    b2 = jax.random.normal(k_b2, (out_features,), jnp.float32) * 0.05

    params = (w1, b1, gamma, beta, w2, b2)
    ref = _reference(x, params)

    # ---- default (bf16 compute) path ----
    prepared, meta = prepare_decoder_rescat_params(params)   # bf16 default
    run = jax.jit(lambda xs, prep: decoder_rescat(xs, prep, meta, tile_n=1024))
    out_padded = jax.block_until_ready(run(x, prepared))
    assert out_padded.shape == (batch, seq, meta["f_out_pad"]), out_padded.shape
    # Padded columns are exact zeros; real columns match within bf16 tolerance.
    assert jnp.all(out_padded[..., out_features:] == 0.0)
    out = out_padded[..., :out_features]
    assert jnp.allclose(out, ref, atol=3e-2, rtol=3e-2), (
        float(jnp.max(jnp.abs(out - ref))))

    # ---- f32 compute path (tight tolerance sanity check) ----
    prepared32, meta32 = prepare_decoder_rescat_params(
        params, compute_dtype=jnp.float32)
    run32 = jax.jit(lambda xs, prep: decoder_rescat(xs, prep, meta32, tile_n=1024))
    out32 = jax.block_until_ready(run32(x, prepared32))[..., :out_features]
    assert jnp.allclose(out32, ref, atol=1e-4, rtol=1e-4), (
        float(jnp.max(jnp.abs(out32 - ref))))

    print("KERNEL_OK")
</pallas_src>

<mosaic_0001>
module attributes {stable_mosaic.version = 11 : i64} {
  func.func @_decoder_rescat_kernel(%arg0: i32, %arg1: memref<8x64xf32, #tpu.memory_space<vmem>>, %arg2: memref<64x256xbf16, #tpu.memory_space<vmem>>, %arg3: memref<1x128xf32, #tpu.memory_space<vmem>>, %arg4: memref<1x128xf32, #tpu.memory_space<vmem>>, %arg5: memref<1x128xf32, #tpu.memory_space<vmem>>, %arg6: memref<128x128xbf16, #tpu.memory_space<vmem>>, %arg7: memref<1x128xf32, #tpu.memory_space<vmem>>, %arg8: memref<8x128xf32, #tpu.memory_space<vmem>>) attributes {dimension_semantics = [#tpu.dimension_semantics<parallel>], iteration_bounds = array<i64: 2>, scalar_prefetch = 0 : i64, scratch_operands = 0 : i64, tpu.core_type = #tpu.core_type<tc>, window_params = [{transform_indices = @transform_0, window_bounds = array<i64: 8, 64>}, {pipeline_mode = #tpu.pipeline_mode<synchronous>, transform_indices = @transform_1, window_bounds = array<i64: 64, 256>}, {pipeline_mode = #tpu.pipeline_mode<synchronous>, transform_indices = @transform_2, window_bounds = array<i64: 1, 128>}, {pipeline_mode = #tpu.pipeline_mode<synchronous>, transform_indices = @transform_3, window_bounds = array<i64: 1, 128>}, {pipeline_mode = #tpu.pipeline_mode<synchronous>, transform_indices = @transform_4, window_bounds = array<i64: 1, 128>}, {pipeline_mode = #tpu.pipeline_mode<synchronous>, transform_indices = @transform_5, window_bounds = array<i64: 128, 128>}, {pipeline_mode = #tpu.pipeline_mode<synchronous>, transform_indices = @transform_6, window_bounds = array<i64: 1, 128>}, {transform_indices = @transform_7, window_bounds = array<i64: 8, 128>}]} {
    %c0 = arith.constant 0 : index
    %c0_0 = arith.constant 0 : index
    %0 = vector.load %arg1[%c0, %c0_0] : memref<8x64xf32, #tpu.memory_space<vmem>>, vector<8x64xf32>
    %1 = arith.truncf %0 : vector<8x64xf32> to vector<8x64xbf16>
    %c0_1 = arith.constant 0 : index
    %c0_2 = arith.constant 0 : index
    %2 = vector.load %arg2[%c0_1, %c0_2] : memref<64x256xbf16, #tpu.memory_space<vmem>>, vector<64x256xbf16>
    %cst = arith.constant dense<0.000000e+00> : vector<8x256xf32>
    %3 = tpu.matmul %1, %2, %cst {dimension_numbers = #tpu.dot_dimension_numbers<[1], [0], [0], [1], [0, 0, 1, 1], [], []>} : vector<8x64xbf16>, vector<64x256xbf16>, vector<8x256xf32> -> vector<8x256xf32>
    %4 = vector.extract_strided_slice %3 {offsets = [0, 0], sizes = [8, 128], strides = [1, 1]} : vector<8x256xf32> to vector<8x128xf32>
    %c0_3 = arith.constant 0 : index
    %c0_4 = arith.constant 0 : index
    %5 = vector.load %arg3[%c0_3, %c0_4] : memref<1x128xf32, #tpu.memory_space<vmem>>, vector<1x128xf32>
    %6 = vector.broadcast %5 : vector<1x128xf32> to vector<8x128xf32>
    %7 = arith.addf %4, %6 : vector<8x128xf32>
    %8 = vector.extract_strided_slice %3 {offsets = [0, 128], sizes = [8, 128], strides = [1, 1]} : vector<8x256xf32> to vector<8x128xf32>
    %cst_5 = arith.constant dense<0.000000e+00> : vector<8xf32>
    %9 = vector.multi_reduction <add>, %7, %cst_5 [1] : vector<8x128xf32> to vector<8xf32>
    %10 = vector.shape_cast %9 : vector<8xf32> to vector<8x1xf32>
    %cst_6 = arith.constant 3.125000e-02 : f32
    %11 = vector.broadcast %cst_6 : f32 to vector<8x1xf32>
    %12 = arith.mulf %10, %11 : vector<8x1xf32>
    %13 = arith.mulf %7, %7 : vector<8x128xf32>
    %cst_7 = arith.constant dense<0.000000e+00> : vector<8xf32>
    %14 = vector.multi_reduction <add>, %13, %cst_7 [1] : vector<8x128xf32> to vector<8xf32>
    %15 = vector.shape_cast %14 : vector<8xf32> to vector<8x1xf32>
    %cst_8 = arith.constant 3.125000e-02 : f32
    %16 = vector.broadcast %cst_8 : f32 to vector<8x1xf32>
    %17 = arith.mulf %15, %16 : vector<8x1xf32>
    %18 = arith.mulf %12, %12 : vector<8x1xf32>
    %19 = arith.subf %17, %18 : vector<8x1xf32>
    %c0_9 = arith.constant 0 : index
    %c0_10 = arith.constant 0 : index
    %20 = vector.load %arg4[%c0_9, %c0_10] : memref<1x128xf32, #tpu.memory_space<vmem>>, vector<1x128xf32>
    %cst_11 = arith.constant 9.99999974E-6 : f32
    %21 = vector.broadcast %cst_11 : f32 to vector<8x1xf32>
    %22 = arith.addf %19, %21 : vector<8x1xf32>
    %23 = math.rsqrt %22 : vector<8x1xf32>
    %24 = vector.broadcast %20 : vector<1x128xf32> to vector<8x128xf32>
    %25 = vector.broadcast %23 : vector<8x1xf32> to vector<8x128xf32>
    %26 = arith.mulf %24, %25 : vector<8x128xf32>
    %27 = vector.broadcast %12 : vector<8x1xf32> to vector<8x128xf32>
    %28 = arith.subf %7, %27 : vector<8x128xf32>
    %29 = arith.mulf %28, %26 : vector<8x128xf32>
    %c0_12 = arith.constant 0 : index
    %c0_13 = arith.constant 0 : index
    %30 = vector.load %arg5[%c0_12, %c0_13] : memref<1x128xf32, #tpu.memory_space<vmem>>, vector<1x128xf32>
    %31 = vector.broadcast %30 : vector<1x128xf32> to vector<8x128xf32>
    %32 = arith.addf %29, %31 : vector<8x128xf32>
    %cst_14 = arith.constant 0.000000e+00 : f32
    %33 = vector.broadcast %cst_14 : f32 to vector<8x128xf32>
    %34 = arith.maximumf %32, %33 : vector<8x128xf32>
    %35 = arith.truncf %34 : vector<8x128xf32> to vector<8x128xbf16>
    %c0_15 = arith.constant 0 : index
    %c0_16 = arith.constant 0 : index
    %36 = vector.load %arg6[%c0_15, %c0_16] : memref<128x128xbf16, #tpu.memory_space<vmem>>, vector<128x128xbf16>
    %cst_17 = arith.constant dense<0.000000e+00> : vector<8x128xf32>
    %37 = tpu.matmul %35, %36, %cst_17 {dimension_numbers = #tpu.dot_dimension_numbers<[1], [0], [0], [1], [0, 0, 1, 1], [], []>} : vector<8x128xbf16>, vector<128x128xbf16>, vector<8x128xf32> -> vector<8x128xf32>
    %38 = arith.addf %8, %37 : vector<8x128xf32>
    %c0_18 = arith.constant 0 : index
    %c0_19 = arith.constant 0 : index
    %39 = vector.load %arg7[%c0_18, %c0_19] : memref<1x128xf32, #tpu.memory_space<vmem>>, vector<1x128xf32>
    %40 = vector.broadcast %39 : vector<1x128xf32> to vector<8x128xf32>
    %41 = arith.addf %38, %40 : vector<8x128xf32>
    %c0_20 = arith.constant 0 : index
    %c0_21 = arith.constant 0 : index
    %42 = vector.load %arg8[%c0_20, %c0_21] : memref<8x128xf32, #tpu.memory_space<vmem>>, vector<8x128xf32>
    tpu.vector_store %arg8[%c0_20, %c0_21], %41 {strides = array<i32>} : memref<8x128xf32, #tpu.memory_space<vmem>>, vector<8x128xf32>,
    return
  }
  func.func @transform_0(%arg0: i32) -> (i32, i32) {
    %c0_i32 = arith.constant 0 : i32
    %c0_i32_0 = arith.constant 0 : i32
    return %arg0, %c0_i32 : i32, i32
  }
  func.func @transform_1(%arg0: i32) -> (i32, i32) {
    %c0_i32 = arith.constant 0 : i32
    %c0_i32_0 = arith.constant 0 : i32
    %c0_i32_1 = arith.constant 0 : i32
    return %c0_i32, %c0_i32_0 : i32, i32
  }
  func.func @transform_2(%arg0: i32) -> (i32, i32) {
    %c0_i32 = arith.constant 0 : i32
    %c0_i32_0 = arith.constant 0 : i32
    %c0_i32_1 = arith.constant 0 : i32
    return %c0_i32, %c0_i32_0 : i32, i32
  }
  func.func @transform_3(%arg0: i32) -> (i32, i32) {
    %c0_i32 = arith.constant 0 : i32
    %c0_i32_0 = arith.constant 0 : i32
    %c0_i32_1 = arith.constant 0 : i32
    return %c0_i32, %c0_i32_0 : i32, i32
  }
  func.func @transform_4(%arg0: i32) -> (i32, i32) {
    %c0_i32 = arith.constant 0 : i32
    %c0_i32_0 = arith.constant 0 : i32
    %c0_i32_1 = arith.constant 0 : i32
    return %c0_i32, %c0_i32_0 : i32, i32
  }
  func.func @transform_5(%arg0: i32) -> (i32, i32) {
    %c0_i32 = arith.constant 0 : i32
    %c0_i32_0 = arith.constant 0 : i32
    %c0_i32_1 = arith.constant 0 : i32
    return %c0_i32, %c0_i32_0 : i32, i32
  }
  func.func @transform_6(%arg0: i32) -> (i32, i32) {
    %c0_i32 = arith.constant 0 : i32
    %c0_i32_0 = arith.constant 0 : i32
    %c0_i32_1 = arith.constant 0 : i32
    return %c0_i32, %c0_i32_0 : i32, i32
  }
  func.func @transform_7(%arg0: i32) -> (i32, i32) {
    %c0_i32 = arith.constant 0 : i32
    %c0_i32_0 = arith.constant 0 : i32
    return %arg0, %c0_i32 : i32, i32
  }
}

</mosaic_0001>

<llo_original>
// kernel: _lambda_.1
$region0: #{_lambda_.1}
  #allocation0 [shape = 'u32[]', space=smem, size = 0x4, offset = 0x4, fixed_abs, tag = 'smem constant byte address 0x4 - core index']
  #allocation1 [shape = 'u32[144,128]{1,0:T(1,128)}', space=vmem, size = 0x12000, scoped, tag = 'internal scratch']
  %s0 = inlined_call_operand.hbm [shape: f32[16,64], index: 0, kind: input, shape index: {}]
  %s1 = inlined_call_operand.hbm [shape: bf16[64,256], index: 1, kind: input, shape index: {}]
  %s2 = inlined_call_operand.vmem [shape: f32[1,128], index: 2, kind: input, shape index: {}]
  %s3 = inlined_call_operand.vmem [shape: f32[1,128], index: 3, kind: input, shape index: {}]
  %s4 = inlined_call_operand.vmem [shape: f32[1,128], index: 4, kind: input, shape index: {}]
  %s5 = inlined_call_operand.hbm [shape: bf16[128,128], index: 5, kind: input, shape index: {}]
  %s6 = inlined_call_operand.vmem [shape: f32[1,128], index: 6, kind: input, shape index: {}]
  %s7 = inlined_call_operand.hbm [shape: f32[16,128], index: 7, kind: output, shape index: {}]
  %s8 = sld [smem:[#allocation0]]
  $region73: #{_lambda_.1} parent=0
    _
  %s10 = ssub.s32 1, %s8
  %s11 = scalar_select 0, %s10, %s8
  $region1: #{_lambda_.1} parent=0
    #allocation2 [shape = 'u8[8192]{0}', space=vmem, size = 0x2000, scoped, tag = 'input window, operand 0']
    #allocation3 [shape = 's32[2]{0}', space=sflag, size = 0x8, scoped, tag = 'scoped memory for _lambda_.1']
    #allocation4 [shape = 's32[2]{0}', space=sflag, size = 0x8, scoped, tag = 'scoped memory for _lambda_.1']
    #allocation5 [shape = 'u8[32768]{0}', space=vmem, size = 0x8000, scoped, tag = 'input window, operand 1, single buffered']
    #allocation6 [shape = 's32[1]{0}', space=sflag, size = 0x4, scoped, tag = 'scoped memory for _lambda_.1']
    #allocation7 [shape = 'u8[32768]{0}', space=vmem, size = 0x8000, scoped, tag = 'input window, operand 5, single buffered']
    #allocation8 [shape = 'u8[8192]{0}', space=vmem, size = 0x2000, scoped, tag = 'output window, operand 0']
    %12 = vsyncpa [#allocation3], 0
    %s13 = scalar_lea.sflag [#allocation3], 1
    %14 = vsyncpa %s13, 0
    %15 = vsyncpa [#allocation6], 0
    %16 = vsyncpa [#allocation4], 0
    %s17 = scalar_lea.sflag [#allocation4], 1
    %18 = vsyncpa %s17, 0
    loop: start=0, step=1, limit=4
    $region2: #{_lambda_.1} parent=1 // loop_pre_header
      _
    $region3: #{_lambda_.1} parent=1 // loop_header
      %s20 = sphi 0, %s24
      %p21 = scmp.ge.s32.totalorder %s20, 4
      %s30 = sphi 0, %s32
      %s33 = sphi 0, %s30
      %s34 = sphi 0, %s33
      %s50 = sphi 0, %s34
      %s54 = sphi 0, %s54
      %s56 = sphi 0, %s54
      %s57 = sphi 0, %s56
      %s71 = sphi 0, %s57
      %s75 = sphi 0, %s75
      %s77 = sphi 0, %s75
      %s78 = sphi 0, %s77
      %s92 = sphi 0, %s78
      %s96 = sphi 0, %s96
      %s98 = sphi 0, %s96
      %s99 = sphi 0, %s98
      %s113 = sphi 0, %s99
      %s117 = sphi 0, %s117
      %s119 = sphi 0, %s117
      %s120 = sphi 0, %s119
      %s134 = sphi 0, %s120
      %s138 = sphi 0, %s138
      %s140 = sphi 0, %s138
      %s141 = sphi 0, %s140
      %s155 = sphi 0, %s141
      %s159 = sphi 0, %s159
      %s161 = sphi 0, %s159
      %s162 = sphi 0, %s161
      %s176 = sphi 0, %s162
      %s182 = sphi 0, %s184
      %s185 = sphi 0, %s182
      %s186 = sphi 0, %s185
      %s202 = sphi 0, %s186
    $region4: #{_lambda_.1} parent=1 // loop_header_branch
      %23 = sbr.rel (%p21) target = $region8
    $region5: #{_lambda_.1} parent=1 // loop_body
      %s25 = ssub.s32 %s20, 1
      %s26 = ssub.s32 %s20, 2
      %s27 = sadd.s32 %s20, 1
      %s28 = ssub.s32 %s20, %s27
      %p29 = scmp.eq.s32.totalorder %s28, 0
      %s31 = sadd.s32 %s30, 1
      %s32 = scalar_select %p29, %s30, %s31
      %p35 = pneg %p29
      %p36 = scmp.eq.s32.totalorder %s20, 1
      %p37 = por %p35, %p36
      %p38 = scmp.ne.s32.totalorder %s30, %s33
      %p39 = scmp.eq.s32.totalorder %s20, 0
      %p40 = por %p38, %p39
      %p41 = scmp.ne.s32.totalorder %s30, %s33
      %p42 = scmp.eq.s32.totalorder %s25, 1
      %p43 = por %p41, %p42
      %p44 = scmp.ne.s32.totalorder %s33, %s34
      %p45 = scmp.eq.s32.totalorder %s25, 0
      %p46 = por %p44, %p45
      %p47 = scmp.ne.s32.totalorder %s33, %s34
      %p48 = scmp.eq.s32.totalorder %s26, 1
      %p49 = por %p47, %p48
      %p51 = scmp.ne.s32.totalorder %s34, %s50
      %p52 = scmp.eq.s32.totalorder %s26, 0
      %p53 = por %p51, %p52
      %s55 = sadd.s32 %s54, 1
      %p58 = scmp.eq.s32.totalorder %s20, 1
      %p59 = scmp.ne.s32.totalorder %s54, %s56
      %p60 = scmp.eq.s32.totalorder %s20, 0
      %p61 = por %p59, %p60
      %p62 = scmp.ne.s32.totalorder %s54, %s56
      %p63 = scmp.eq.s32.totalorder %s25, 1
      %p64 = por %p62, %p63
      %p65 = scmp.ne.s32.totalorder %s56, %s57
      %p66 = scmp.eq.s32.totalorder %s25, 0
      %p67 = por %p65, %p66
      %p68 = scmp.ne.s32.totalorder %s56, %s57
      %p69 = scmp.eq.s32.totalorder %s26, 1
      %p70 = por %p68, %p69
      %p72 = scmp.ne.s32.totalorder %s57, %s71
      %p73 = scmp.eq.s32.totalorder %s26, 0
      %p74 = por %p72, %p73
      %s76 = sadd.s32 %s75, 1
      %p79 = scmp.eq.s32.totalorder %s20, 1
      %p80 = scmp.ne.s32.totalorder %s75, %s77
      %p81 = scmp.eq.s32.totalorder %s20, 0
      %p82 = por %p80, %p81
      %p83 = scmp.ne.s32.totalorder %s75, %s77
      %p84 = scmp.eq.s32.totalorder %s25, 1
      %p85 = por %p83, %p84
      %p86 = scmp.ne.s32.totalorder %s77, %s78
      %p87 = scmp.eq.s32.totalorder %s25, 0
      %p88 = por %p86, %p87
      %p89 = scmp.ne.s32.totalorder %s77, %s78
      %p90 = scmp.eq.s32.totalorder %s26, 1
      %p91 = por %p89, %p90
      %p93 = scmp.ne.s32.totalorder %s78, %s92
      %p94 = scmp.eq.s32.totalorder %s26, 0
      %p95 = por %p93, %p94
      %s97 = sadd.s32 %s96, 1
      %p100 = scmp.eq.s32.totalorder %s20, 1
      %p101 = scmp.ne.s32.totalorder %s96, %s98
      %p102 = scmp.eq.s32.totalorder %s20, 0
      %p103 = por %p101, %p102
      %p104 = scmp.ne.s32.totalorder %s96, %s98
      %p105 = scmp.eq.s32.totalorder %s25, 1
      %p106 = por %p104, %p105
      %p107 = scmp.ne.s32.totalorder %s98, %s99
      %p108 = scmp.eq.s32.totalorder %s25, 0
      %p109 = por %p107, %p108
      %p110 = scmp.ne.s32.totalorder %s98, %s99
      %p111 = scmp.eq.s32.totalorder %s26, 1
      %p112 = por %p110, %p111
      %p114 = scmp.ne.s32.totalorder %s99, %s113
      %p115 = scmp.eq.s32.totalorder %s26, 0
      %p116 = por %p114, %p115
      %s118 = sadd.s32 %s117, 1
      %p121 = scmp.eq.s32.totalorder %s20, 1
      %p122 = scmp.ne.s32.totalorder %s117, %s119
      %p123 = scmp.eq.s32.totalorder %s20, 0
      %p124 = por %p122, %p123
      %p125 = scmp.ne.s32.totalorder %s117, %s119
      %p126 = scmp.eq.s32.totalorder %s25, 1
      %p127 = por %p125, %p126
      %p128 = scmp.ne.s32.totalorder %s119, %s120
      %p129 = scmp.eq.s32.totalorder %s25, 0
      %p130 = por %p128, %p129
      %p131 = scmp.ne.s32.totalorder %s119, %s120
      %p132 = scmp.eq.s32.totalorder %s26, 1
      %p133 = por %p131, %p132
      %p135 = scmp.ne.s32.totalorder %s120, %s134
      %p136 = scmp.eq.s32.totalorder %s26, 0
      %p137 = por %p135, %p136
      %s139 = sadd.s32 %s138, 1
      %p142 = scmp.eq.s32.totalorder %s20, 1
      %p143 = scmp.ne.s32.totalorder %s138, %s140
      %p144 = scmp.eq.s32.totalorder %s20, 0
      %p145 = por %p143, %p144
      %p146 = scmp.ne.s32.totalorder %s138, %s140
      %p147 = scmp.eq.s32.totalorder %s25, 1
      %p148 = por %p146, %p147
      %p149 = scmp.ne.s32.totalorder %s140, %s141
      %p150 = scmp.eq.s32.totalorder %s25, 0
      %p151 = por %p149, %p150
      %p152 = scmp.ne.s32.totalorder %s140, %s141
      %p153 = scmp.eq.s32.totalorder %s26, 1
      %p154 = por %p152, %p153
      %p156 = scmp.ne.s32.totalorder %s141, %s155
      %p157 = scmp.eq.s32.totalorder %s26, 0
      %p158 = por %p156, %p157
      %s160 = sadd.s32 %s159, 1
      %p163 = scmp.eq.s32.totalorder %s20, 1
      %p164 = scmp.ne.s32.totalorder %s159, %s161
      %p165 = scmp.eq.s32.totalorder %s20, 0
      %p166 = por %p164, %p165
      %p167 = scmp.ne.s32.totalorder %s159, %s161
      %p168 = scmp.eq.s32.totalorder %s25, 1
      %p169 = por %p167, %p168
      %p170 = scmp.ne.s32.totalorder %s161, %s162
      %p171 = scmp.eq.s32.totalorder %s25, 0
      %p172 = por %p170, %p171
      %p173 = scmp.ne.s32.totalorder %s161, %s162
      %p174 = scmp.eq.s32.totalorder %s26, 1
      %p175 = por %p173, %p174
      %p177 = scmp.ne.s32.totalorder %s162, %s176
      %p178 = scmp.eq.s32.totalorder %s26, 0
      %p179 = por %p177, %p178
      %s180 = ssub.s32 %s20, %s27
      %p181 = scmp.eq.s32.totalorder %s180, 0
      %s183 = sadd.s32 %s182, 1
      %s184 = scalar_select %p181, %s182, %s183
      %p187 = pneg %p181
      %p188 = scmp.eq.s32.totalorder %s20, 1
      %p189 = por %p187, %p188
      %p190 = scmp.ne.s32.totalorder %s182, %s185
      %p191 = scmp.eq.s32.totalorder %s20, 0
      %p192 = por %p190, %p191
      %p193 = scmp.ne.s32.totalorder %s182, %s185
      %p194 = scmp.eq.s32.totalorder %s25, 1
      %p195 = por %p193, %p194
      %p196 = scmp.ne.s32.totalorder %s185, %s186
      %p197 = scmp.eq.s32.totalorder %s25, 0
      %p198 = por %p196, %p197
      %p199 = scmp.ne.s32.totalorder %s185, %s186
      %p200 = scmp.eq.s32.totalorder %s26, 1
      %p201 = por %p199, %p200
      %p203 = scmp.ne.s32.totalorder %s186, %s202
      %p204 = scmp.eq.s32.totalorder %s26, 0
      %p205 = por %p203, %p204
      %p206 = scmp.le.s32.totalorder 1, %s20
      %p207 = scmp.lt.s32.totalorder %s20, 3
      %p208 = pnand %p206, %p207
      %p209 = pneg %p208
      // Predicated region
      $region9: #{_lambda_.1} parent=5 // pred_check
        _
      $region10: #{_lambda_.1} parent=5 // pred_check_branch
        %211 = sbr.rel (%p208) target = $region12
      $region11: #{_lambda_.1} parent=5 // pred_region
        %s212 = ssub.s32 %s20, 1
        // Predicated region
        $region13: #{_lambda_.1} parent=11 // pred_check
          %p213 = pneg %p67
        $region14: #{_lambda_.1} parent=11 // pred_check_branch
          %215 = sbr.rel (%p213) target = $region16
        $region15: #{_lambda_.1} parent=11 // pred_region
          %s217 = ssub.s32 1024, 1024
          %218 = vsyncadd [#allocation6], %s217
          %s219 = sshll.u32 [#allocation5], 4
          %s220 = int_to_ptr.vmem [resolvable:$true] %s219
          %225 = dma.hbm_to_vmem [thread:$0]  %s1, 1024, %s220, [#allocation6], 128, 128, 8
        $region16: #{_lambda_.1} parent=11 // pred_fallthru
          _
        // Predicated region
        $region17: #{_lambda_.1} parent=11 // pred_check
          %p226 = pneg %p88
        $region18: #{_lambda_.1} parent=11 // pred_check_branch
          %228 = sbr.rel (%p226) target = $region20
        $region19: #{_lambda_.1} parent=11 // pred_region
          _
        $region20: #{_lambda_.1} parent=11 // pred_fallthru
          _
        // Predicated region
        $region21: #{_lambda_.1} parent=11 // pred_check
          %p229 = pneg %p109
        $region22: #{_lambda_.1} parent=11 // pred_check_branch
          %231 = sbr.rel (%p229) target = $region24
        $region23: #{_lambda_.1} parent=11 // pred_region
          _
        $region24: #{_lambda_.1} parent=11 // pred_fallthru
          _
        // Predicated region
        $region25: #{_lambda_.1} parent=11 // pred_check
          %p232 = pneg %p130
        $region26: #{_lambda_.1} parent=11 // pred_check_branch
          %234 = sbr.rel (%p232) target = $region28
        $region27: #{_lambda_.1} parent=11 // pred_region
          _
        $region28: #{_lambda_.1} parent=11 // pred_fallthru
          _
        // Predicated region
        $region29: #{_lambda_.1} parent=11 // pred_check
          %p235 = pneg %p151
        $region30: #{_lambda_.1} parent=11 // pred_check_branch
          %237 = sbr.rel (%p235) target = $region32
        $region31: #{_lambda_.1} parent=11 // pred_region
          %s239 = ssub.s32 1024, 1024
          %240 = vsyncadd [#allocation6], %s239
          %s241 = sshll.u32 [#allocation7], 4
          %s242 = int_to_ptr.vmem [resolvable:$true] %s241
          %247 = dma.hbm_to_vmem [thread:$0]  %s5, 1024, %s242, [#allocation6], 64, 64, 4
        $region32: #{_lambda_.1} parent=11 // pred_fallthru
          _
        // Predicated region
        $region33: #{_lambda_.1} parent=11 // pred_check
          %p248 = pneg %p172
        $region34: #{_lambda_.1} parent=11 // pred_check_branch
          %250 = sbr.rel (%p248) target = $region36
        $region35: #{_lambda_.1} parent=11 // pred_region
          _
        $region36: #{_lambda_.1} parent=11 // pred_fallthru
          _
      $region12: #{_lambda_.1} parent=5 // pred_fallthru
        _
      %p251 = scmp.lt.s32.totalorder %s20, 2
      // Predicated region
      $region37: #{_lambda_.1} parent=5 // pred_check
        %p252 = pneg %p251
      $region38: #{_lambda_.1} parent=5 // pred_check_branch
        %254 = sbr.rel (%p252) target = $region40
      $region39: #{_lambda_.1} parent=5 // pred_region
        // Predicated region
        $region41: #{_lambda_.1} parent=39 // pred_check
          %p255 = pneg %p40
        $region42: #{_lambda_.1} parent=39 // pred_check_branch
          %257 = sbr.rel (%p255) target = $region44
        $region43: #{_lambda_.1} parent=39 // pred_region
          %s258 = sand.u32 %s30, 1
          %s259 = scalar_lea.sflag [#allocation3], %s258
          %s260 = sand.u32 %s30, 1
          %s261 = smul.addr %s260, 8
          %s262 = scalar_lea.vmem [#allocation2], %s261
          %s264 = ssub.s32 128, 128
          %265 = vsyncadd %s259, %s264
          %s266 = smul.addr %s20, 128
          %s267 = scalar_lea.hbm %s0, %s266
          %s269 = sshll.u32 %s262, 4
          %s270 = int_to_ptr.vmem [resolvable:$true] %s269
          %272 = dma.hbm_to_vmem [thread:$0]  %s267, 128, %s270, %s259
        $region44: #{_lambda_.1} parent=39 // pred_fallthru
          _
      $region40: #{_lambda_.1} parent=5 // pred_fallthru
        _
      %p273 = scmp.le.s32.totalorder 1, %s20
      %p274 = scmp.lt.s32.totalorder %s20, 3
      %p275 = pnand %p273, %p274
      %p276 = pneg %p275
      // Predicated region
      $region45: #{_lambda_.1} parent=5 // pred_check
        _
      $region46: #{_lambda_.1} parent=5 // pred_check_branch
        %278 = sbr.rel (%p275) target = $region48
      $region47: #{_lambda_.1} parent=5 // pred_region
        %s279 = ssub.s32 %s20, 1
        %s280 = sand.u32 %s33, 1
        %s281 = scalar_lea.sflag [#allocation3], %s280
        %s282 = sand.u32 %s33, 1
        %s283 = smul.addr %s282, 8
        %s284 = scalar_lea.vmem [#allocation2], %s283
        // Predicated region
        $region49: #{_lambda_.1} parent=47 // pred_check
          %p285 = pneg %p46
        $region50: #{_lambda_.1} parent=47 // pred_check_branch
          %287 = sbr.rel (%p285) target = $region52
        $region51: #{_lambda_.1} parent=47 // pred_region
          %288 = dma.done %s281, 128
        $region52: #{_lambda_.1} parent=47 // pred_fallthru
          _
        // Predicated region
        $region53: #{_lambda_.1} parent=47 // pred_check
          %p289 = pneg %p67
        $region54: #{_lambda_.1} parent=47 // pred_check_branch
          %291 = sbr.rel (%p289) target = $region56
        $region55: #{_lambda_.1} parent=47 // pred_region
          %292 = dma.done [#allocation6], 1024
        $region56: #{_lambda_.1} parent=47 // pred_fallthru
          _
        // Predicated region
        $region57: #{_lambda_.1} parent=47 // pred_check
          %p293 = pneg %p151
        $region58: #{_lambda_.1} parent=47 // pred_check_branch
          %295 = sbr.rel (%p293) target = $region60
        $region59: #{_lambda_.1} parent=47 // pred_region
          %296 = dma.done [#allocation6], 1024
        $region60: #{_lambda_.1} parent=47 // pred_fallthru
          _
        %s297 = sand.u32 %s33, 1
        %s298 = scalar_lea.sflag [#allocation3], %s297
        %s299 = sand.u32 %s33, 1
        %s300 = smul.addr %s299, 8
        %s301 = scalar_lea.vmem [#allocation2], %s300
        %p302 = pneg %p46
        %p303 = pneg %p43
        %p304 = pneg %p67
        %p305 = pneg %p64
        %p306 = pneg %p88
        %p307 = pneg %p85
        %p308 = pneg %p109
        %p309 = pneg %p106
        %p310 = pneg %p130
        %p311 = pneg %p127
        %p312 = pneg %p151
        %p313 = pneg %p148
        %p314 = pneg %p172
        %p315 = pneg %p169
        %p316 = pneg %p198
        %p317 = pneg %p195
        %s318 = sand.u32 %s185, 1
        %s319 = scalar_lea.sflag [#allocation4], %s318
        %s320 = sand.u32 %s185, 1
        %s321 = smul.addr %s320, 8
        %s322 = scalar_lea.vmem [#allocation8], %s321
        %v324 = vld [vmem:[%s284] sm:$0xff]
        %v325 = vpack.c.bf16 %v324, %v324
        %v326 = vld [vmem:[#allocation5] sm:$0xff]
        %v327 = vld [vmem:[#allocation5 + $0x8] sm:$0xff]
        %v328 = vld [vmem:[#allocation5 + $0x10] sm:$0xff]
        %v329 = vld [vmem:[#allocation5 + $0x18] sm:$0xff]
        %v330 = vld [vmem:[#allocation5 + $0x20] sm:$0xff]
        %v331 = vld [vmem:[#allocation5 + $0x28] sm:$0xff]
        %v332 = vld [vmem:[#allocation5 + $0x30] sm:$0xff]
        %v333 = vld [vmem:[#allocation5 + $0x38] sm:$0xff]
        %v342 = vunpack.c.l.b16 %v326
        %v343 = vunpack.c.h.b16 %v326
        %v344 = vunpack.c.l.b16 %v327
        %v345 = vunpack.c.h.b16 %v327
        %v346 = vunpack.c.l.b16 %v328
        %v347 = vunpack.c.h.b16 %v328
        %v348 = vunpack.c.l.b16 %v329
        %v349 = vunpack.c.h.b16 %v329
        %v350 = vunpack.c.l.b16 %v330
        %v351 = vunpack.c.h.b16 %v330
        %v352 = vunpack.c.l.b16 %v331
        %v353 = vunpack.c.h.b16 %v331
        %v354 = vunpack.c.l.b16 %v332
        %v355 = vunpack.c.h.b16 %v332
        %v356 = vunpack.c.l.b16 %v333
        %v357 = vunpack.c.h.b16 %v333
        %v358 = vpack.c.b16 %v344, %v342
        %v359 = vpack.c.b16 %v345, %v343
        %v360 = vpack.c.b16 %v348, %v346
        %v361 = vpack.c.b16 %v349, %v347
        %v362 = vpack.c.b16 %v352, %v350
        %v363 = vpack.c.b16 %v353, %v351
        %v364 = vpack.c.b16 %v356, %v354
        %v365 = vpack.c.b16 %v357, %v355
        %vm374 = vcmask 523264
        %v376 = vsel %vm374, %v325, 0
        %378 = vmatprep.subr.bf16.mxu0 0
        %379 = vmatpush1.bf16.msra.mxu0 0
        %380 = vmatprep.subr.bf16.mxu0 0
        %381 = vmatpush1.bf16.msra.mxu0 0
        %382 = vmatprep.subr.bf16.mxu0 0
        %383 = vmatpush1.bf16.msra.mxu0 0
        %384 = vmatprep.subr.bf16.mxu0 0
        %385 = vmatpush1.bf16.msra.mxu0 0
        %386 = vmatprep.subr.bf16.mxu0 %v365
        %387 = vmatpush1.bf16.msra.mxu0 %v364
        %388 = vmatprep.subr.bf16.mxu0 %v363
        %389 = vmatpush1.bf16.msra.mxu0 %v362
        %390 = vmatprep.subr.bf16.mxu0 %v361
        %391 = vmatpush1.bf16.msra.mxu0 %v360
        %392 = vmatprep.subr.bf16.mxu0 %v359
        %393 = vmatpush1.bf16.msra.mxu0 %v358
        %394 = vmatprep.subr.bf16.mxu0 0
        %395 = vmatpush2.bf16.msra.mxu0 0
        %396 = vmatprep.subr.bf16.mxu0 0
        %397 = vmatpush2.bf16.msra.mxu0 0
        %398 = vmatprep.subr.bf16.mxu0 0
        %399 = vmatpush2.bf16.msra.mxu0 0
        %400 = vmatprep.subr.bf16.mxu0 0
        %401 = vmatpush2.bf16.msra.mxu0 0
        %402 = vmatprep.subr.bf16.mxu0 0
        %403 = vmatpush2.bf16.msra.mxu0 0
        %404 = vmatprep.subr.bf16.mxu0 0
        %405 = vmatpush2.bf16.msra.mxu0 0
        %406 = vmatprep.subr.bf16.mxu0 0
        %407 = vmatpush2.bf16.msra.mxu0 0
        %408 = vmatprep.subr.bf16.mxu0 0
        %409 = vmatpush2.bf16.msra.mxu0 0
        %410 = vmatprep.mubr.bf16.mxu0 0
        %411 = vmatmul.mubr.bf16.gmra.mxu0 %v376
        %v412 = vpop.f32.mrf.mxu0
        %v413 = vadd.f32 0.0, %v412
        %v414 = vpop.f32.mrf.mxu0
        %v415 = vadd.f32 0.0, %v414
        %v416 = vpop.f32.mrf.mxu0
        %v417 = vpop.f32.mrf.mxu0
        %418 = vdwg.mxu0
        %v419 = vld [vmem:[%s2] sm:$0x1]
        %v421 = vlaneseq
        %v422 = vshrl.u32 %v421, 7
        %v423 = vsub.s32 0, %v422
        %v424 = vrot.slane %v419, %v423
        %v426 = vadd.f32 %v413, %v424
        %427 = vadd.xlane.f32.xlu0 %v426
        %v428 = vpop.xlane.xlu0 %427
        %v429 = vmul.f32 %v428, 0.03125
        %v430 = vmul.f32 %v426, %v426
        %431 = vadd.xlane.f32.xlu0 %v430
        %v432 = vpop.xlane.xlu0 %431
        %v433 = vmul.f32 %v432, 0.03125
        %v434 = vmul.f32 %v429, %v429
        %v435 = vsub.f32 %v433, %v434
        %v436 = vld [vmem:[%s3] sm:$0x1]
        %v437 = vadd.f32 %v435, 1e-05
        %v438 = vrsqrt.pop %v437
        %v440 = vlaneseq
        %v441 = vshrl.u32 %v440, 7
        %v442 = vsub.s32 0, %v441
        %v443 = vrot.slane %v436, %v442
        %v445 = vmul.f32 %v443, %v438
        %v446 = vsub.f32 %v426, %v429
        %v447 = vmul.f32 %v446, %v445
        %v448 = vld [vmem:[%s4] sm:$0x1]
        %v450 = vlaneseq
        %v451 = vshrl.u32 %v450, 7
        %v452 = vsub.s32 0, %v451
        %v453 = vrot.slane %v448, %v452
        %v455 = vadd.f32 %v447, %v453
        %v456 = vmax.f32 %v455, 0.0
        %v457 = vpack.c.bf16 %v456, %v456
        %v458 = vld [vmem:[#allocation7] sm:$0xf]
        %v459 = vld [vmem:[#allocation7 + $0x4] sm:$0xf]
        %v460 = vld [vmem:[#allocation7 + $0x8] sm:$0xf]
        %v461 = vld [vmem:[#allocation7 + $0xc] sm:$0xf]
        %v462 = vld [vmem:[#allocation7 + $0x10] sm:$0xf]
        %v463 = vld [vmem:[#allocation7 + $0x14] sm:$0xf]
        %v464 = vld [vmem:[#allocation7 + $0x18] sm:$0xf]
        %v465 = vld [vmem:[#allocation7 + $0x1c] sm:$0xf]
        %v466 = vld [vmem:[#allocation7 + $0x20] sm:$0xf]
        %v467 = vld [vmem:[#allocation7 + $0x24] sm:$0xf]
        %v468 = vld [vmem:[#allocation7 + $0x28] sm:$0xf]
        %v469 = vld [vmem:[#allocation7 + $0x2c] sm:$0xf]
        %v470 = vld [vmem:[#allocation7 + $0x30] sm:$0xf]
        %v471 = vld [vmem:[#allocation7 + $0x34] sm:$0xf]
        %v472 = vld [vmem:[#allocation7 + $0x38] sm:$0xf]
        %v473 = vld [vmem:[#allocation7 + $0x3c] sm:$0xf]
        %v490 = vunpack.c.l.b16 %v458
        %v491 = vunpack.c.l.b16 %v459
        %v492 = vunpack.c.l.b16 %v460
        %v493 = vunpack.c.l.b16 %v461
        %v494 = vunpack.c.l.b16 %v462
        %v495 = vunpack.c.l.b16 %v463
        %v496 = vunpack.c.l.b16 %v464
        %v497 = vunpack.c.l.b16 %v465
        %v498 = vunpack.c.l.b16 %v466
        %v499 = vunpack.c.l.b16 %v467
        %v500 = vunpack.c.l.b16 %v468
        %v501 = vunpack.c.l.b16 %v469
        %v502 = vunpack.c.l.b16 %v470
        %v503 = vunpack.c.l.b16 %v471
        %v504 = vunpack.c.l.b16 %v472
        %v505 = vunpack.c.l.b16 %v473
        %v506 = vpack.c.b16 %v491, %v490
        %v507 = vpack.c.b16 %v493, %v492
        %v508 = vpack.c.b16 %v495, %v494
        %v509 = vpack.c.b16 %v497, %v496
        %v510 = vpack.c.b16 %v499, %v498
        %v511 = vpack.c.b16 %v501, %v500
        %v512 = vpack.c.b16 %v503, %v502
        %v513 = vpack.c.b16 %v505, %v504
        %522 = vmatprep.subr.bf16.mxu0 0
        %523 = vmatpush1.bf16.msra.mxu0 %v513
        %524 = vmatprep.subr.bf16.mxu0 0
        %525 = vmatpush1.bf16.msra.mxu0 %v512
        %526 = vmatprep.subr.bf16.mxu0 0
        %527 = vmatpush1.bf16.msra.mxu0 %v511
        %528 = vmatprep.subr.bf16.mxu0 0
        %529 = vmatpush1.bf16.msra.mxu0 %v510
        %530 = vmatprep.subr.bf16.mxu0 0
        %531 = vmatpush1.bf16.msra.mxu0 %v509
        %532 = vmatprep.subr.bf16.mxu0 0
        %533 = vmatpush1.bf16.msra.mxu0 %v508
        %534 = vmatprep.subr.bf16.mxu0 0
        %535 = vmatpush1.bf16.msra.mxu0 %v507
        %536 = vmatprep.subr.bf16.mxu0 0
        %537 = vmatpush1.bf16.msra.mxu0 %v506
        %538 = vmatprep.subr.bf16.mxu0 0
        %539 = vmatpush2.bf16.msra.mxu0 0
        %540 = vmatprep.subr.bf16.mxu0 0
        %541 = vmatpush2.bf16.msra.mxu0 0
        %542 = vmatprep.subr.bf16.mxu0 0
        %543 = vmatpush2.bf16.msra.mxu0 0
        %544 = vmatprep.subr.bf16.mxu0 0
        %545 = vmatpush2.bf16.msra.mxu0 0
        %546 = vmatprep.subr.bf16.mxu0 0
        %547 = vmatpush2.bf16.msra.mxu0 0
        %548 = vmatprep.subr.bf16.mxu0 0
        %549 = vmatpush2.bf16.msra.mxu0 0
        %550 = vmatprep.subr.bf16.mxu0 0
        %551 = vmatpush2.bf16.msra.mxu0 0
        %552 = vmatprep.subr.bf16.mxu0 0
        %553 = vmatpush2.bf16.msra.mxu0 0
        %554 = vmatprep.mubr.bf16.mxu0 0
        %555 = vmatmul.mubr.bf16.gmra.mxu0 %v457
        %v556 = vpop.f32.mrf.mxu0
        %v557 = vadd.f32 0.0, %v556
        %v558 = vpop.f32.mrf.mxu0
        %v559 = vpop.f32.mrf.mxu0
        %v560 = vpop.f32.mrf.mxu0
        %561 = vdwg.mxu0
        %v562 = vadd.f32 %v415, %v557
        %v563 = vld [vmem:[%s6] sm:$0x1]
        %v565 = vlaneseq
        %v566 = vshrl.u32 %v565, 7
        %v567 = vsub.s32 0, %v566
        %v568 = vrot.slane %v563, %v567
        %v570 = vadd.f32 %v562, %v568
        %571 = vst [vmem:[%s322] sm:$0xff] %v570
        %s572 = sand.u32 %s185, 1
        %s573 = scalar_lea.sflag [#allocation4], %s572
        %s574 = sand.u32 %s185, 1
        %s575 = smul.addr %s574, 8
        %s576 = scalar_lea.vmem [#allocation8], %s575
        // Predicated region
        $region61: #{_lambda_.1} parent=47 // pred_check
          %p577 = pneg %p195
        $region62: #{_lambda_.1} parent=47 // pred_check_branch
          %579 = sbr.rel (%p577) target = $region64
        $region63: #{_lambda_.1} parent=47 // pred_region
          %s581 = ssub.s32 128, 128
          %582 = vsyncadd %s573, %s581
          %s583 = smul.addr %s25, 128
          %s584 = scalar_lea.hbm %s7, %s583
          %s586 = sshll.u32 %s576, 4
          %s587 = int_to_ptr.vmem [resolvable:$true] %s586
          %589 = dma.vmem_to_hbm [thread:$0]  %s587, 128, %s584, %s573
        $region64: #{_lambda_.1} parent=47 // pred_fallthru
          _
      $region48: #{_lambda_.1} parent=5 // pred_fallthru
        _
      %p590 = scmp.le.s32.totalorder 2, %s20
      // Predicated region
      $region65: #{_lambda_.1} parent=5 // pred_check
        %p591 = pneg %p590
      $region66: #{_lambda_.1} parent=5 // pred_check_branch
        %593 = sbr.rel (%p591) target = $region68
      $region67: #{_lambda_.1} parent=5 // pred_region
        %s594 = ssub.s32 %s20, 2
        // Predicated region
        $region69: #{_lambda_.1} parent=67 // pred_check
          %p595 = pneg %p201
        $region70: #{_lambda_.1} parent=67 // pred_check_branch
          %597 = sbr.rel (%p595) target = $region72
        $region71: #{_lambda_.1} parent=67 // pred_region
          %s598 = sand.u32 %s186, 1
          %s599 = scalar_lea.sflag [#allocation4], %s598
          %s600 = sand.u32 %s186, 1
          %s601 = smul.addr %s600, 8
          %s602 = scalar_lea.vmem [#allocation8], %s601
          %603 = dma.done %s599, 128
        $region72: #{_lambda_.1} parent=67 // pred_fallthru
          _
      $region68: #{_lambda_.1} parent=5 // pred_fallthru
        _
    $region6: #{_lambda_.1} parent=1 // loop_footer
      %s24 = sadd.s32 1, %s20
    $region7: #{_lambda_.1} parent=1 // loop_footer_branch
      %19 = sbr.rel target = $region3
    $region8: #{_lambda_.1} parent=1 // loop_exit
      _
    %604 = vsyncpa [#allocation3], 1
    %s605 = scalar_lea.sflag [#allocation3], 1
    %606 = vsyncpa %s605, 1
    %607 = vsyncpa [#allocation6], 1
    %608 = vsyncpa [#allocation4], 1
    %s609 = scalar_lea.sflag [#allocation4], 1
    %610 = vsyncpa %s609, 1

</llo_original>
